<compile_context>
chip_gen: v7x
topology: tpu7x:2x2x1
jax: 0.10.0
libtpu: 0.0.40
codegen_flags: <defaults>
</compile_context>

<pallas_src>
import jax
import jax.numpy as jnp
from jax import lax
from jax.experimental import pallas as pl
from jax.experimental.pallas import tpu as pltpu


# ---------------------------------------------------------------------------
# helpers
# ---------------------------------------------------------------------------
def _round_up(x, m):
    return ((x + m - 1) // m) * m


def _pick_tile(dim, cap, mult):
    """Largest tile <= cap that divides dim and is a multiple of mult (else full dim)."""
    if dim <= cap:
        return dim
    t = (cap // mult) * mult
    while t >= mult:
        if dim % t == 0:
            return t
        t -= mult
    return dim


def _vmem_limit(block_bytes):
    """Scoped-VMEM limit: 2x estimated demand, clamped to a v7x-safe range."""
    return int(min(max(2 * block_bytes, 16 * 2**20), 48 * 2**20))


def _itemsize(dt):
    return jnp.dtype(dt).itemsize


# ---------------------------------------------------------------------------
# generic tiled matmul + bias kernel  (used for x-projection and vocab head)
# ---------------------------------------------------------------------------
def _matmul_bias_kernel(x_ref, w_ref, b_ref, o_ref):
    acc = jnp.dot(x_ref[...], w_ref[...], preferred_element_type=jnp.float32)
    o_ref[...] = (acc + b_ref[...]).astype(o_ref.dtype)


def matmul_bias(x, w, b, out_dtype=jnp.float32):
    """x: (M, K), w: (K, N), b: (1, N) -> (M, N) in out_dtype (f32 accumulation).

    K and N must already be multiples of 128 (the packer guarantees this).
    M is padded internally to a multiple of 256 so tm is MXU-native; the pad
    rows are sliced off before returning.
    """
    M, K = x.shape
    K2, N = w.shape
    assert K == K2 and b.shape == (1, N)
    assert K % 128 == 0 and N % 128 == 0, (K, N)

    M_pad = _round_up(M, 256)
    if M_pad != M:
        x = jnp.pad(x, ((0, M_pad - M), (0, 0)))
    tm = 256
    tn = _pick_tile(N, 512, 128)
    grid = (M_pad // tm, N // tn)

    blk_bytes = (2 * tm * K * _itemsize(x.dtype)        # x blocks (double-buffered)
                 + 2 * K * tn * _itemsize(w.dtype)      # w blocks
                 + 2 * 8 * tn * _itemsize(b.dtype)      # bias (sublane-padded)
                 + 2 * tm * tn * _itemsize(out_dtype))  # out blocks

    out = pl.pallas_call(
        _matmul_bias_kernel,
        out_shape=jax.ShapeDtypeStruct((M_pad, N), out_dtype),
        grid_spec=pltpu.PrefetchScalarGridSpec(
            num_scalar_prefetch=0,
            grid=grid,
            in_specs=[
                pl.BlockSpec((tm, K), lambda i, j: (i, 0)),
                pl.BlockSpec((K, tn), lambda i, j: (0, j)),
                pl.BlockSpec((1, tn), lambda i, j: (0, j)),
            ],
            out_specs=pl.BlockSpec((tm, tn), lambda i, j: (i, j)),
        ),
        compiler_params=pltpu.CompilerParams(
            dimension_semantics=("parallel", "parallel"),
            vmem_limit_bytes=_vmem_limit(blk_bytes)),
    )(x, w, b)
    return out[:M] if M_pad != M else out


# ---------------------------------------------------------------------------
# recurrent LSTM kernel: time axis tiled onto the grid, persistent h/c scratch
# ---------------------------------------------------------------------------
def _lstm_recurrent_kernel(xg_ref, whh_ref, hout_ref, h_sc, c_sc):
    # xg_ref   : (Tt, Bt, 4*H) bf16   -- precomputed x @ W_ih + bias
    # whh_ref  : (H, 4*H)       bf16
    # hout_ref : (Tt, Bt, H)    bf16
    # h_sc/c_sc: (Bt, H)        f32   -- persist across the time grid axis
    Tt = xg_ref.shape[0]
    H = h_sc.shape[1]

    @pl.when(pl.program_id(1) == 0)          # first time-chunk of this batch chunk
    def _():
        h_sc[...] = jnp.zeros_like(h_sc)
        c_sc[...] = jnp.zeros_like(c_sc)

    def step(tt, carry):
        x_gates = xg_ref[tt].astype(jnp.float32)                 # (Bt, 4H) f32
        gates = x_gates + jnp.dot(
            h_sc[...].astype(jnp.bfloat16), whh_ref[...],
            preferred_element_type=jnp.float32)                  # (Bt, 4H) f32

        # PyTorch gate order i, f, g, o; H is a multiple of 128 -> lane-aligned slices.
        i_g = jax.nn.sigmoid(gates[:, 0 * H:1 * H])
        f_g = jax.nn.sigmoid(gates[:, 1 * H:2 * H])
        g_g = jnp.tanh(gates[:, 2 * H:3 * H])
        o_g = jax.nn.sigmoid(gates[:, 3 * H:4 * H])

        c_new = f_g * c_sc[...] + i_g * g_g
        h_new = o_g * jnp.tanh(c_new)
        c_sc[...] = c_new
        h_sc[...] = h_new
        hout_ref[tt] = h_new.astype(hout_ref.dtype)
        return carry

    # Unrolled so the LLO scheduler can overlap step t's store/VPU work with
    # step t+1's matmul issue.
    lax.fori_loop(0, Tt, step, None, unroll=True)


def lstm_recurrent(xg_tbg, w_hh_p):
    """xg_tbg: (T, B, 4*H_pad) bf16, w_hh_p: (H_pad, 4*H_pad) bf16 -> (T, B, H_pad) bf16."""
    T, B, G4 = xg_tbg.shape
    H_pad = w_hh_p.shape[0]
    assert G4 == 4 * H_pad

    # Split the batch across megacore TCs when it divides cleanly into >=8-row
    # lane-legal chunks; a no-op on single-TC chips and for small B.
    nb = 2 if (B % 16 == 0) else 1
    Bt = B // nb
    # Tile the time axis so xg/hout chunks stay small and pipeline against compute.
    Tt = _pick_tile(T, 16, 1)
    nt = T // Tt

    bt_pad = max(Bt, 8)  # sublane padding of the B dim in VMEM
    blk_bytes = (2 * Tt * bt_pad * G4 * 2          # xg blocks (bf16), double-buffered
                 + 2 * H_pad * G4 * 2              # w_hh (bf16)
                 + 2 * Tt * bt_pad * H_pad * 2     # hout blocks (bf16)
                 + 2 * bt_pad * H_pad * 4)         # h/c scratch (f32)

    return pl.pallas_call(
        _lstm_recurrent_kernel,
        out_shape=jax.ShapeDtypeStruct((T, B, H_pad), jnp.bfloat16),
        grid_spec=pltpu.PrefetchScalarGridSpec(
            num_scalar_prefetch=0,
            grid=(nb, nt),                                        # batch x time
            in_specs=[
                pl.BlockSpec((Tt, Bt, G4), lambda b, t: (t, b, 0)),
                pl.BlockSpec((H_pad, G4), lambda b, t: (0, 0)),
            ],
            out_specs=pl.BlockSpec((Tt, Bt, H_pad), lambda b, t: (t, b, 0)),
            scratch_shapes=[
                pltpu.VMEM((Bt, H_pad), jnp.float32),             # h state (f32)
                pltpu.VMEM((Bt, H_pad), jnp.float32),             # c state (f32)
            ],
        ),
        compiler_params=pltpu.CompilerParams(
            dimension_semantics=("parallel", "arbitrary"),        # serial over time
            vmem_limit_bytes=_vmem_limit(blk_bytes)),
    )(xg_tbg, w_hh_p)


# ---------------------------------------------------------------------------
# parameter init / packing
# ---------------------------------------------------------------------------
def init_decoder_params(key, embed_size, hidden_size, vocab_size):
    k1, k2, k3, k4, k5, k6 = jax.random.split(key, 6)
    scale = 0.1
    return {
        "embed": scale * jax.random.normal(k1, (vocab_size, embed_size), jnp.float32),
        # stored pre-transposed for the kernels: (in, 4H) / (H, 4H); gate order i,f,g,o
        "w_ih": scale * jax.random.normal(k2, (embed_size, 4 * hidden_size), jnp.float32),
        "w_hh": scale * jax.random.normal(k3, (hidden_size, 4 * hidden_size), jnp.float32),
        # combined bias_ih + bias_hh of the PyTorch LSTM
        "bias": scale * jax.random.normal(k4, (1, 4 * hidden_size), jnp.float32),
        "w_out": scale * jax.random.normal(k5, (hidden_size, vocab_size), jnp.float32),
        "b_out": scale * jax.random.normal(k6, (1, vocab_size), jnp.float32),
    }


def pack_decoder_params(params):
    """Pad E/H/V to multiples of 128 (lane alignment) and cast weights to bf16."""
    E = params["w_ih"].shape[0]
    H = params["w_hh"].shape[0]
    V = params["w_out"].shape[1]
    E_pad = _round_up(E, 128)
    H_pad = _round_up(H, 128)
    V_pad = _round_up(V, 128)

    def pad_gates(w, rows, rows_pad):
        w4 = w.reshape(rows, 4, H)
        w4 = jnp.pad(w4, ((0, rows_pad - rows), (0, 0), (0, H_pad - H)))
        return w4.reshape(rows_pad, 4 * H_pad)

    w_ih_p = pad_gates(params["w_ih"], E, E_pad).astype(jnp.bfloat16)
    w_hh_p = pad_gates(params["w_hh"], H, H_pad).astype(jnp.bfloat16)
    bias4 = params["bias"].reshape(1, 4, H)
    bias_p = jnp.pad(bias4, ((0, 0), (0, 0), (0, H_pad - H))).reshape(1, 4 * H_pad)
    bias_p = bias_p.astype(jnp.float32)
    w_out_p = jnp.pad(params["w_out"],
                      ((0, H_pad - H), (0, V_pad - V))).astype(jnp.bfloat16)
    b_out_p = jnp.pad(params["b_out"], ((0, 0), (0, V_pad - V))).astype(jnp.float32)

    return {
        "embed": params["embed"],
        "w_ih_p": w_ih_p, "w_hh_p": w_hh_p, "bias_p": bias_p,
        "w_out_p": w_out_p, "b_out_p": b_out_p,
        "E": E, "H": H, "V": V,
    }


# ---------------------------------------------------------------------------
# forward pass
# ---------------------------------------------------------------------------
def decoder_forward(packed, features, captions):
    """features: (B, E) f32; captions: (B, Tc) int32 -> logits (B, Tc, V) f32."""
    embed = packed["embed"]
    E = packed["E"]
    V = packed["V"]
    E_pad = packed["w_ih_p"].shape[0]
    H_pad = packed["w_hh_p"].shape[0]

    cap_emb = jnp.take(embed, captions[:, :-1], axis=0)                # (B, T-1, E)
    emb = jnp.concatenate([features[:, None, :], cap_emb], axis=1)     # (B, T, E)
    B, T, _ = emb.shape

    # time-major, bf16, pad E to lane multiple (tiny tensor -> cheap)
    x = jnp.transpose(emb, (1, 0, 2)).astype(jnp.bfloat16)             # (T, B, E)
    x = jnp.pad(x, ((0, 0), (0, 0), (0, E_pad - E)))                   # (T, B, E_pad)

    # 1) hoisted input projection: one big matmul, xg stored in bf16
    xg2d = matmul_bias(x.reshape(T * B, E_pad), packed["w_ih_p"], packed["bias_p"],
                       out_dtype=jnp.bfloat16)
    xg = xg2d.reshape(T, B, 4 * H_pad)                                 # bf16

    # 2) serial recurrence (only h @ W_hh per step), time axis pipelined on the grid
    h_seq = lstm_recurrent(xg, packed["w_hh_p"])                       # (T, B, H_pad) bf16

    # 3) hoisted vocab projection: transpose the small bf16 h_seq so the big
    #    logits tensor is produced directly in (B, T, V_pad) layout.
    h_bt = jnp.transpose(h_seq, (1, 0, 2)).reshape(B * T, H_pad)       # (B*T, H_pad) bf16
    logits2d = matmul_bias(h_bt, packed["w_out_p"], packed["b_out_p"],
                           out_dtype=jnp.float32)                      # (B*T, V_pad) f32
    logits = logits2d.reshape(B, T, -1)                                # (B, T, V_pad)
    return logits[:, :, :V]


# TODO(synk): Decoder.sample() (greedy decode with host-side early stop) is not
# implemented; only the training-time forward() is translated.


# ---------------------------------------------------------------------------
# matched-precision pure-JAX reference (bf16 matmul inputs, f32 accumulation)
# ---------------------------------------------------------------------------
def _reference_forward(params, features, captions):
    H = params["w_hh"].shape[0]
    w_ih = params["w_ih"].astype(jnp.bfloat16)
    w_hh = params["w_hh"].astype(jnp.bfloat16)
    w_out = params["w_out"].astype(jnp.bfloat16)

    cap_emb = jnp.take(params["embed"], captions[:, :-1], axis=0)
    emb = jnp.concatenate([features[:, None, :], cap_emb], axis=1)     # (B, T, E)
    B, T, _ = emb.shape
    x_tbe = jnp.transpose(emb, (1, 0, 2)).astype(jnp.bfloat16)

    def step(carry, x_t):
        h, c = carry
        gates = (jnp.dot(x_t, w_ih, preferred_element_type=jnp.float32)
                 + jnp.dot(h.astype(jnp.bfloat16), w_hh,
                           preferred_element_type=jnp.float32)
                 + params["bias"])
        i = jax.nn.sigmoid(gates[:, 0 * H:1 * H])
        f = jax.nn.sigmoid(gates[:, 1 * H:2 * H])
        g = jnp.tanh(gates[:, 2 * H:3 * H])
        o = jax.nn.sigmoid(gates[:, 3 * H:4 * H])
        c = f * c + i * g
        h = o * jnp.tanh(c)
        return (h, c), h

    h0 = jnp.zeros((B, H), jnp.float32)
    _, hs = jax.lax.scan(step, (h0, h0), x_tbe)                        # (T, B, H) f32
    logits = (jnp.dot(hs.astype(jnp.bfloat16).reshape(T * B, H), w_out,
                      preferred_element_type=jnp.float32)
              + params["b_out"])
    return jnp.transpose(logits.reshape(T, B, -1), (1, 0, 2))


if __name__ == "__main__":
    batch = 2
    embed_size = 32
    hidden_size = 32
    vocab_size = 64
    caption_len = 8   # LSTM sees T = caption_len (features + first caption_len-1 tokens)

    key = jax.random.PRNGKey(0)
    k_params, k_feat, k_cap = jax.random.split(key, 3)

    params = init_decoder_params(k_params, embed_size, hidden_size, vocab_size)
    packed = pack_decoder_params(params)
    features = jax.random.normal(k_feat, (batch, embed_size), jnp.float32)
    captions = jax.random.randint(k_cap, (batch, caption_len), 0, vocab_size, jnp.int32)

    out = decoder_forward(packed, features, captions)
    out = jax.block_until_ready(out)
    assert out.shape == (batch, caption_len, vocab_size), out.shape

    ref = jax.block_until_ready(_reference_forward(params, features, captions))
    assert jnp.allclose(out, ref, atol=2e-2, rtol=2e-2), (
        "mismatch vs reference: max abs diff = %f" % float(jnp.max(jnp.abs(out - ref))))

    print("KERNEL_OK")
</pallas_src>

<mosaic_0001>
module attributes {stable_mosaic.version = 11 : i64} {
  func.func @_matmul_bias_kernel(%arg0: i32, %arg1: i32, %arg2: memref<256x128xbf16, #tpu.memory_space<vmem>>, %arg3: memref<128x512xbf16, #tpu.memory_space<vmem>>, %arg4: memref<1x512xf32, #tpu.memory_space<vmem>>, %arg5: memref<256x512xbf16, #tpu.memory_space<vmem>>) attributes {dimension_semantics = [#tpu.dimension_semantics<parallel>, #tpu.dimension_semantics<parallel>], iteration_bounds = array<i64: 1, 1>, scalar_prefetch = 0 : i64, scratch_operands = 0 : i64, tpu.core_type = #tpu.core_type<tc>, window_params = [{transform_indices = @transform_0, window_bounds = array<i64: 256, 128>}, {transform_indices = @transform_1, window_bounds = array<i64: 128, 512>}, {transform_indices = @transform_2, window_bounds = array<i64: 1, 512>}, {transform_indices = @transform_3, window_bounds = array<i64: 256, 512>}]} {
    %c0 = arith.constant 0 : index
    %c0_0 = arith.constant 0 : index
    %0 = vector.load %arg2[%c0, %c0_0] : memref<256x128xbf16, #tpu.memory_space<vmem>>, vector<256x128xbf16>
    %c0_1 = arith.constant 0 : index
    %c0_2 = arith.constant 0 : index
    %1 = vector.load %arg3[%c0_1, %c0_2] : memref<128x512xbf16, #tpu.memory_space<vmem>>, vector<128x512xbf16>
    %cst = arith.constant dense<0.000000e+00> : vector<256x512xf32>
    %2 = tpu.matmul %0, %1, %cst {dimension_numbers = #tpu.dot_dimension_numbers<[1], [0], [0], [1], [0, 0, 1, 1], [], []>} : vector<256x128xbf16>, vector<128x512xbf16>, vector<256x512xf32> -> vector<256x512xf32>
    %c0_3 = arith.constant 0 : index
    %c0_4 = arith.constant 0 : index
    %3 = vector.load %arg4[%c0_3, %c0_4] : memref<1x512xf32, #tpu.memory_space<vmem>>, vector<1x512xf32>
    %4 = vector.broadcast %3 : vector<1x512xf32> to vector<256x512xf32>
    %5 = arith.addf %2, %4 : vector<256x512xf32>
    %6 = arith.truncf %5 : vector<256x512xf32> to vector<256x512xbf16>
    %c0_5 = arith.constant 0 : index
    %c0_6 = arith.constant 0 : index
    %7 = vector.load %arg5[%c0_5, %c0_6] : memref<256x512xbf16, #tpu.memory_space<vmem>>, vector<256x512xbf16>
    tpu.vector_store %arg5[%c0_5, %c0_6], %6 {strides = array<i32>} : memref<256x512xbf16, #tpu.memory_space<vmem>>, vector<256x512xbf16>,
    return
  }
  func.func @transform_0(%arg0: i32, %arg1: i32) -> (i32, i32) {
    %c0_i32 = arith.constant 0 : i32
    %c0_i32_0 = arith.constant 0 : i32
    return %arg0, %c0_i32 : i32, i32
  }
  func.func @transform_1(%arg0: i32, %arg1: i32) -> (i32, i32) {
    %c0_i32 = arith.constant 0 : i32
    %c0_i32_0 = arith.constant 0 : i32
    return %c0_i32, %arg1 : i32, i32
  }
  func.func @transform_2(%arg0: i32, %arg1: i32) -> (i32, i32) {
    %c0_i32 = arith.constant 0 : i32
    %c0_i32_0 = arith.constant 0 : i32
    return %c0_i32, %arg1 : i32, i32
  }
  func.func @transform_3(%arg0: i32, %arg1: i32) -> (i32, i32) {
    %c0_i32 = arith.constant 0 : i32
    return %arg0, %arg1 : i32, i32
  }
}

</mosaic_0001>

<llo_original>
// kernel: tpu_custom_call.1
$region0: #{tpu_custom_call.1}
  #allocation0 [shape = 'u32[]', space=smem, size = 0x4, offset = 0x4, fixed_abs, tag = 'smem constant byte address 0x4 - core index']
  #allocation1 [shape = 'u32[144,128]{1,0:T(1,128)}', space=vmem, size = 0x12000, scoped, tag = 'internal scratch']
  %s0 = inlined_call_operand.hbm [shape: bf16[256,128], index: 0, kind: input, shape index: {}]
  %s1 = inlined_call_operand.hbm [shape: bf16[128,512], index: 1, kind: input, shape index: {}]
  %s2 = inlined_call_operand.vmem [shape: f32[1,512], index: 2, kind: input, shape index: {}]
  %s3 = inlined_call_operand.hbm [shape: bf16[256,512], index: 3, kind: output, shape index: {}]
  %s4 = sld [smem:[#allocation0]]
  $region30: #{tpu_custom_call.1} parent=0
    _
  %s6 = ssub.s32 1, %s4
  %s7 = scalar_select 0, %s6, %s4
  $region1: #{tpu_custom_call.1} parent=0
    #allocation2 [shape = 'u8[65536]{0}', space=vmem, size = 0x10000, scoped, tag = 'input window, operand 0, single buffered']
    #allocation3 [shape = 's32[1]{0}', space=sflag, size = 0x4, scoped, tag = 'scoped memory for tpu_custom_call.1']
    #allocation4 [shape = 's32[1]{0}', space=sflag, size = 0x4, scoped, tag = 'scoped memory for tpu_custom_call.1']
    #allocation5 [shape = 'u8[131072]{0}', space=vmem, size = 0x20000, scoped, tag = 'input window, operand 1, single buffered']
    #allocation6 [shape = 's32[1]{0}', space=sflag, size = 0x4, scoped, tag = 'scoped memory for tpu_custom_call.1']
    #allocation7 [shape = 'u8[262144]{0}', space=vmem, size = 0x40000, scoped, tag = 'output window, operand 0, single buffered']
    %8 = vsyncpa [#allocation3], 0
    %9 = vsyncpa [#allocation6], 0
    %10 = vsyncpa [#allocation4], 0
    // Predicated region
    $region2: #{tpu_custom_call.1} parent=1 // pred_check
      _
    $region3: #{tpu_custom_call.1} parent=1 // pred_check_branch
      %12 = sbr.rel (0) target = $region5
    $region4: #{tpu_custom_call.1} parent=1 // pred_region
      %s14 = ssub.s32 2048, 2048
      %15 = vsyncadd [#allocation3], %s14
      %s16 = sshll.u32 [#allocation2], 4
      %s17 = int_to_ptr.vmem [resolvable:$true] %s16
      %22 = dma.hbm_to_vmem [thread:$0]  %s0, 2048, %s17, [#allocation3], 64, 64, 4
    $region5: #{tpu_custom_call.1} parent=1 // pred_fallthru
      _
    // Predicated region
    $region6: #{tpu_custom_call.1} parent=1 // pred_check
      _
    $region7: #{tpu_custom_call.1} parent=1 // pred_check_branch
      %24 = sbr.rel (0) target = $region9
    $region8: #{tpu_custom_call.1} parent=1 // pred_region
      %s26 = ssub.s32 4096, 4096
      %27 = vsyncadd [#allocation6], %s26
      %s28 = sshll.u32 [#allocation5], 4
      %s29 = int_to_ptr.vmem [resolvable:$true] %s28
      %34 = dma.hbm_to_vmem [thread:$0]  %s1, 4096, %s29, [#allocation6], 256, 256, 16
    $region9: #{tpu_custom_call.1} parent=1 // pred_fallthru
      _
    // Predicated region
    $region10: #{tpu_custom_call.1} parent=1 // pred_check
      _
    $region11: #{tpu_custom_call.1} parent=1 // pred_check_branch
      %36 = sbr.rel (0) target = $region13
    $region12: #{tpu_custom_call.1} parent=1 // pred_region
      _
    $region13: #{tpu_custom_call.1} parent=1 // pred_fallthru
      _
    // Predicated region
    $region14: #{tpu_custom_call.1} parent=1 // pred_check
      _
    $region15: #{tpu_custom_call.1} parent=1 // pred_check_branch
      %38 = sbr.rel (0) target = $region17
    $region16: #{tpu_custom_call.1} parent=1 // pred_region
      %39 = dma.done [#allocation3], 2048
    $region17: #{tpu_custom_call.1} parent=1 // pred_fallthru
      _
    // Predicated region
    $region18: #{tpu_custom_call.1} parent=1 // pred_check
      _
    $region19: #{tpu_custom_call.1} parent=1 // pred_check_branch
      %41 = sbr.rel (0) target = $region21
    $region20: #{tpu_custom_call.1} parent=1 // pred_region
      %42 = dma.done [#allocation6], 4096
    $region21: #{tpu_custom_call.1} parent=1 // pred_fallthru
      _
    %v44 = vld [vmem:[#allocation2] sm:$0xf]
    %v45 = vld [vmem:[#allocation2 + $0x4] sm:$0xf]
    %v46 = vld [vmem:[#allocation2 + $0x8] sm:$0xf]
    %v47 = vld [vmem:[#allocation2 + $0xc] sm:$0xf]
    %v48 = vld [vmem:[#allocation2 + $0x10] sm:$0xf]
    %v49 = vld [vmem:[#allocation2 + $0x14] sm:$0xf]
    %v50 = vld [vmem:[#allocation2 + $0x18] sm:$0xf]
    %v51 = vld [vmem:[#allocation2 + $0x1c] sm:$0xf]
    %v52 = vld [vmem:[#allocation2 + $0x20] sm:$0xf]
    %v53 = vld [vmem:[#allocation2 + $0x24] sm:$0xf]
    %v54 = vld [vmem:[#allocation2 + $0x28] sm:$0xf]
    %v55 = vld [vmem:[#allocation2 + $0x2c] sm:$0xf]
    %v56 = vld [vmem:[#allocation2 + $0x30] sm:$0xf]
    %v57 = vld [vmem:[#allocation2 + $0x34] sm:$0xf]
    %v58 = vld [vmem:[#allocation2 + $0x38] sm:$0xf]
    %v59 = vld [vmem:[#allocation2 + $0x3c] sm:$0xf]
    %v60 = vld [vmem:[#allocation2 + $0x40] sm:$0xf]
    %v61 = vld [vmem:[#allocation2 + $0x44] sm:$0xf]
    %v62 = vld [vmem:[#allocation2 + $0x48] sm:$0xf]
    %v63 = vld [vmem:[#allocation2 + $0x4c] sm:$0xf]
    %v64 = vld [vmem:[#allocation2 + $0x50] sm:$0xf]
    %v65 = vld [vmem:[#allocation2 + $0x54] sm:$0xf]
    %v66 = vld [vmem:[#allocation2 + $0x58] sm:$0xf]
    %v67 = vld [vmem:[#allocation2 + $0x5c] sm:$0xf]
    %v68 = vld [vmem:[#allocation2 + $0x60] sm:$0xf]
    %v69 = vld [vmem:[#allocation2 + $0x64] sm:$0xf]
    %v70 = vld [vmem:[#allocation2 + $0x68] sm:$0xf]
    %v71 = vld [vmem:[#allocation2 + $0x6c] sm:$0xf]
    %v72 = vld [vmem:[#allocation2 + $0x70] sm:$0xf]
    %v73 = vld [vmem:[#allocation2 + $0x74] sm:$0xf]
    %v74 = vld [vmem:[#allocation2 + $0x78] sm:$0xf]
    %v75 = vld [vmem:[#allocation2 + $0x7c] sm:$0xf]
    %v76 = vld [vmem:[#allocation5] sm:$0xff]
    %v77 = vld [vmem:[#allocation5 + $0x8] sm:$0xff]
    %v78 = vld [vmem:[#allocation5 + $0x10] sm:$0xff]
    %v79 = vld [vmem:[#allocation5 + $0x18] sm:$0xff]
    %v80 = vld [vmem:[#allocation5 + $0x20] sm:$0xff]
    %v81 = vld [vmem:[#allocation5 + $0x28] sm:$0xff]
    %v82 = vld [vmem:[#allocation5 + $0x30] sm:$0xff]
    %v83 = vld [vmem:[#allocation5 + $0x38] sm:$0xff]
    %v84 = vld [vmem:[#allocation5 + $0x40] sm:$0xff]
    %v85 = vld [vmem:[#allocation5 + $0x48] sm:$0xff]
    %v86 = vld [vmem:[#allocation5 + $0x50] sm:$0xff]
    %v87 = vld [vmem:[#allocation5 + $0x58] sm:$0xff]
    %v88 = vld [vmem:[#allocation5 + $0x60] sm:$0xff]
    %v89 = vld [vmem:[#allocation5 + $0x68] sm:$0xff]
    %v90 = vld [vmem:[#allocation5 + $0x70] sm:$0xff]
    %v91 = vld [vmem:[#allocation5 + $0x78] sm:$0xff]
    %v92 = vld [vmem:[#allocation5 + $0x80] sm:$0xff]
    %v93 = vld [vmem:[#allocation5 + $0x88] sm:$0xff]
    %v94 = vld [vmem:[#allocation5 + $0x90] sm:$0xff]
    %v95 = vld [vmem:[#allocation5 + $0x98] sm:$0xff]
    %v96 = vld [vmem:[#allocation5 + $0xa0] sm:$0xff]
    %v97 = vld [vmem:[#allocation5 + $0xa8] sm:$0xff]
    %v98 = vld [vmem:[#allocation5 + $0xb0] sm:$0xff]
    %v99 = vld [vmem:[#allocation5 + $0xb8] sm:$0xff]
    %v100 = vld [vmem:[#allocation5 + $0xc0] sm:$0xff]
    %v101 = vld [vmem:[#allocation5 + $0xc8] sm:$0xff]
    %v102 = vld [vmem:[#allocation5 + $0xd0] sm:$0xff]
    %v103 = vld [vmem:[#allocation5 + $0xd8] sm:$0xff]
    %v104 = vld [vmem:[#allocation5 + $0xe0] sm:$0xff]
    %v105 = vld [vmem:[#allocation5 + $0xe8] sm:$0xff]
    %v106 = vld [vmem:[#allocation5 + $0xf0] sm:$0xff]
    %v107 = vld [vmem:[#allocation5 + $0xf8] sm:$0xff]
    %v108 = vld [vmem:[%s2] sm:$0xf]
    %v110 = vlaneseq
    %v111 = vshrl.u32 %v110, 7
    %v112 = vsub.s32 0, %v111
    %v113 = vrot.slane %v108, %v112
    %v114 = vlaneseq
    %v115 = vshrl.u32 %v114, 7
    %v116 = vsub.s32 1, %v115
    %v117 = vrot.slane %v108, %v116
    %v118 = vlaneseq
    %v119 = vshrl.u32 %v118, 7
    %v120 = vsub.s32 2, %v119
    %v121 = vrot.slane %v108, %v120
    %v122 = vlaneseq
    %v123 = vshrl.u32 %v122, 7
    %v124 = vsub.s32 3, %v123
    %v125 = vrot.slane %v108, %v124
    %v162 = vunpack.c.l.b16 %v44
    %v163 = vunpack.c.l.b16 %v45
    %v164 = vunpack.c.l.b16 %v46
    %v165 = vunpack.c.l.b16 %v47
    %v166 = vunpack.c.l.b16 %v48
    %v167 = vunpack.c.l.b16 %v49
    %v168 = vunpack.c.l.b16 %v50
    %v169 = vunpack.c.l.b16 %v51
    %v170 = vunpack.c.l.b16 %v52
    %v171 = vunpack.c.l.b16 %v53
    %v172 = vunpack.c.l.b16 %v54
    %v173 = vunpack.c.l.b16 %v55
    %v174 = vunpack.c.l.b16 %v56
    %v175 = vunpack.c.l.b16 %v57
    %v176 = vunpack.c.l.b16 %v58
    %v177 = vunpack.c.l.b16 %v59
    %v178 = vunpack.c.l.b16 %v60
    %v179 = vunpack.c.l.b16 %v61
    %v180 = vunpack.c.l.b16 %v62
    %v181 = vunpack.c.l.b16 %v63
    %v182 = vunpack.c.l.b16 %v64
    %v183 = vunpack.c.l.b16 %v65
    %v184 = vunpack.c.l.b16 %v66
    %v185 = vunpack.c.l.b16 %v67
    %v186 = vunpack.c.l.b16 %v68
    %v187 = vunpack.c.l.b16 %v69
    %v188 = vunpack.c.l.b16 %v70
    %v189 = vunpack.c.l.b16 %v71
    %v190 = vunpack.c.l.b16 %v72
    %v191 = vunpack.c.l.b16 %v73
    %v192 = vunpack.c.l.b16 %v74
    %v193 = vunpack.c.l.b16 %v75
    %v194 = vpack.c.b16 %v163, %v162
    %v195 = vpack.c.b16 %v165, %v164
    %v196 = vpack.c.b16 %v167, %v166
    %v197 = vpack.c.b16 %v169, %v168
    %v198 = vpack.c.b16 %v171, %v170
    %v199 = vpack.c.b16 %v173, %v172
    %v200 = vpack.c.b16 %v175, %v174
    %v201 = vpack.c.b16 %v177, %v176
    %v202 = vpack.c.b16 %v179, %v178
    %v203 = vpack.c.b16 %v181, %v180
    %v204 = vpack.c.b16 %v183, %v182
    %v205 = vpack.c.b16 %v185, %v184
    %v206 = vpack.c.b16 %v187, %v186
    %v207 = vpack.c.b16 %v189, %v188
    %v208 = vpack.c.b16 %v191, %v190
    %v209 = vpack.c.b16 %v193, %v192
    %v258 = vunpack.c.l.b16 %v76
    %v259 = vunpack.c.h.b16 %v76
    %v260 = vunpack.c.l.b16 %v77
    %v261 = vunpack.c.h.b16 %v77
    %v262 = vunpack.c.l.b16 %v78
    %v263 = vunpack.c.h.b16 %v78
    %v264 = vunpack.c.l.b16 %v79
    %v265 = vunpack.c.h.b16 %v79
    %v266 = vunpack.c.l.b16 %v80
    %v267 = vunpack.c.h.b16 %v80
    %v268 = vunpack.c.l.b16 %v81
    %v269 = vunpack.c.h.b16 %v81
    %v270 = vunpack.c.l.b16 %v82
    %v271 = vunpack.c.h.b16 %v82
    %v272 = vunpack.c.l.b16 %v83
    %v273 = vunpack.c.h.b16 %v83
    %v274 = vunpack.c.l.b16 %v84
    %v275 = vunpack.c.h.b16 %v84
    %v276 = vunpack.c.l.b16 %v85
    %v277 = vunpack.c.h.b16 %v85
    %v278 = vunpack.c.l.b16 %v86
    %v279 = vunpack.c.h.b16 %v86
    %v280 = vunpack.c.l.b16 %v87
    %v281 = vunpack.c.h.b16 %v87
    %v282 = vunpack.c.l.b16 %v88
    %v283 = vunpack.c.h.b16 %v88
    %v284 = vunpack.c.l.b16 %v89
    %v285 = vunpack.c.h.b16 %v89
    %v286 = vunpack.c.l.b16 %v90
    %v287 = vunpack.c.h.b16 %v90
    %v288 = vunpack.c.l.b16 %v91
    %v289 = vunpack.c.h.b16 %v91
    %v290 = vunpack.c.l.b16 %v92
    %v291 = vunpack.c.h.b16 %v92
    %v292 = vunpack.c.l.b16 %v93
    %v293 = vunpack.c.h.b16 %v93
    %v294 = vunpack.c.l.b16 %v94
    %v295 = vunpack.c.h.b16 %v94
    %v296 = vunpack.c.l.b16 %v95
    %v297 = vunpack.c.h.b16 %v95
    %v298 = vunpack.c.l.b16 %v96
    %v299 = vunpack.c.h.b16 %v96
    %v300 = vunpack.c.l.b16 %v97
    %v301 = vunpack.c.h.b16 %v97
    %v302 = vunpack.c.l.b16 %v98
    %v303 = vunpack.c.h.b16 %v98
    %v304 = vunpack.c.l.b16 %v99
    %v305 = vunpack.c.h.b16 %v99
    %v306 = vunpack.c.l.b16 %v100
    %v307 = vunpack.c.h.b16 %v100
    %v308 = vunpack.c.l.b16 %v101
    %v309 = vunpack.c.h.b16 %v101
    %v310 = vunpack.c.l.b16 %v102
    %v311 = vunpack.c.h.b16 %v102
    %v312 = vunpack.c.l.b16 %v103
    %v313 = vunpack.c.h.b16 %v103
    %v314 = vunpack.c.l.b16 %v104
    %v315 = vunpack.c.h.b16 %v104
    %v316 = vunpack.c.l.b16 %v105
    %v317 = vunpack.c.h.b16 %v105
    %v318 = vunpack.c.l.b16 %v106
    %v319 = vunpack.c.h.b16 %v106
    %v320 = vunpack.c.l.b16 %v107
    %v321 = vunpack.c.h.b16 %v107
    %v322 = vpack.c.b16 %v262, %v258
    %v323 = vpack.c.b16 %v263, %v259
    %v324 = vpack.c.b16 %v264, %v260
    %v325 = vpack.c.b16 %v265, %v261
    %v326 = vpack.c.b16 %v270, %v266
    %v327 = vpack.c.b16 %v271, %v267
    %v328 = vpack.c.b16 %v272, %v268
    %v329 = vpack.c.b16 %v273, %v269
    %v330 = vpack.c.b16 %v278, %v274
    %v331 = vpack.c.b16 %v279, %v275
    %v332 = vpack.c.b16 %v280, %v276
    %v333 = vpack.c.b16 %v281, %v277
    %v334 = vpack.c.b16 %v286, %v282
    %v335 = vpack.c.b16 %v287, %v283
    %v336 = vpack.c.b16 %v288, %v284
    %v337 = vpack.c.b16 %v289, %v285
    %v338 = vpack.c.b16 %v294, %v290
    %v339 = vpack.c.b16 %v295, %v291
    %v340 = vpack.c.b16 %v296, %v292
    %v341 = vpack.c.b16 %v297, %v293
    %v342 = vpack.c.b16 %v302, %v298
    %v343 = vpack.c.b16 %v303, %v299
    %v344 = vpack.c.b16 %v304, %v300
    %v345 = vpack.c.b16 %v305, %v301
    %v346 = vpack.c.b16 %v310, %v306
    %v347 = vpack.c.b16 %v311, %v307
    %v348 = vpack.c.b16 %v312, %v308
    %v349 = vpack.c.b16 %v313, %v309
    %v350 = vpack.c.b16 %v318, %v314
    %v351 = vpack.c.b16 %v319, %v315
    %v352 = vpack.c.b16 %v320, %v316
    %v353 = vpack.c.b16 %v321, %v317
    %386 = vmatprep.subr.bf16.mxu0 %v323
    %387 = vmatpush1.bf16.msra.mxu0 %v322
    %388 = vmatprep.subr.bf16.mxu0 %v327
    %389 = vmatpush1.bf16.msra.mxu0 %v326
    %390 = vmatprep.subr.bf16.mxu0 %v331
    %391 = vmatpush1.bf16.msra.mxu0 %v330
    %392 = vmatprep.subr.bf16.mxu0 %v335
    %393 = vmatpush1.bf16.msra.mxu0 %v334
    %394 = vmatprep.subr.bf16.mxu0 %v339
    %395 = vmatpush1.bf16.msra.mxu0 %v338
    %396 = vmatprep.subr.bf16.mxu0 %v343
    %397 = vmatpush1.bf16.msra.mxu0 %v342
    %398 = vmatprep.subr.bf16.mxu0 %v347
    %399 = vmatpush1.bf16.msra.mxu0 %v346
    %400 = vmatprep.subr.bf16.mxu0 %v351
    %401 = vmatpush1.bf16.msra.mxu0 %v350
    %402 = vmatprep.subr.bf16.mxu0 0
    %403 = vmatpush1.bf16.msra.mxu0 0
    %404 = vmatprep.subr.bf16.mxu0 0
    %405 = vmatpush1.bf16.msra.mxu0 0
    %406 = vmatprep.subr.bf16.mxu0 0
    %407 = vmatpush1.bf16.msra.mxu0 0
    %408 = vmatprep.subr.bf16.mxu0 0
    %409 = vmatpush1.bf16.msra.mxu0 0
    %410 = vmatprep.subr.bf16.mxu0 0
    %411 = vmatpush1.bf16.msra.mxu0 0
    %412 = vmatprep.subr.bf16.mxu0 0
    %413 = vmatpush1.bf16.msra.mxu0 0
    %414 = vmatprep.subr.bf16.mxu0 0
    %415 = vmatpush1.bf16.msra.mxu0 0
    %416 = vmatprep.subr.bf16.mxu0 0
    %417 = vmatpush1.bf16.msra.mxu0 0
    %418 = vmatprep.mubr.bf16.mxu0 0
    %419 = vmatmul.mubr.bf16.gmra.mrb[0].mxu0 %v194
    %v420 = vpop.f32.mrb[0].mxu0
    %v421 = vadd.f32 %v113, %v420
    %v422 = vpop.f32.mrb[0].mxu0
    %v423 = vadd.f32 %v117, %v422
    %v424 = vpop.f32.mrb[0].mxu0
    %v425 = vadd.f32 %v113, %v424
    %v426 = vpop.f32.mrb[0].mxu0
    %v427 = vadd.f32 %v117, %v426
    %428 = vmatprep.mubr.bf16.mxu0 0
    %429 = vmatmul.mubr.bf16.gmra.mrb[0].mxu0 %v195
    %v430 = vpop.f32.mrb[0].mxu0
    %v431 = vadd.f32 %v113, %v430
    %v432 = vpop.f32.mrb[0].mxu0
    %v433 = vadd.f32 %v117, %v432
    %v434 = vpop.f32.mrb[0].mxu0
    %v435 = vadd.f32 %v113, %v434
    %v436 = vpop.f32.mrb[0].mxu0
    %v437 = vadd.f32 %v117, %v436
    %438 = vmatprep.mubr.bf16.mxu0 0
    %439 = vmatmul.mubr.bf16.gmra.mrb[0].mxu0 %v196
    %v440 = vpop.f32.mrb[0].mxu0
    %v441 = vadd.f32 %v113, %v440
    %v442 = vpop.f32.mrb[0].mxu0
    %v443 = vadd.f32 %v117, %v442
    %v444 = vpop.f32.mrb[0].mxu0
    %v445 = vadd.f32 %v113, %v444
    %v446 = vpop.f32.mrb[0].mxu0
    %v447 = vadd.f32 %v117, %v446
    %448 = vmatprep.mubr.bf16.mxu0 0
    %449 = vmatmul.mubr.bf16.gmra.mrb[0].mxu0 %v197
    %v450 = vpop.f32.mrb[0].mxu0
    %v451 = vadd.f32 %v113, %v450
    %v452 = vpop.f32.mrb[0].mxu0
    %v453 = vadd.f32 %v117, %v452
    %v454 = vpop.f32.mrb[0].mxu0
    %v455 = vadd.f32 %v113, %v454
    %v456 = vpop.f32.mrb[0].mxu0
    %v457 = vadd.f32 %v117, %v456
    %458 = vmatprep.mubr.bf16.mxu0 0
    %459 = vmatmul.mubr.bf16.gmra.mrb[0].mxu0 %v198
    %v460 = vpop.f32.mrb[0].mxu0
    %v461 = vadd.f32 %v113, %v460
    %v462 = vpop.f32.mrb[0].mxu0
    %v463 = vadd.f32 %v117, %v462
    %v464 = vpop.f32.mrb[0].mxu0
    %v465 = vadd.f32 %v113, %v464
    %v466 = vpop.f32.mrb[0].mxu0
    %v467 = vadd.f32 %v117, %v466
    %468 = vmatprep.mubr.bf16.mxu0 0
    %469 = vmatmul.mubr.bf16.gmra.mrb[0].mxu0 %v199
    %v470 = vpop.f32.mrb[0].mxu0
    %v471 = vadd.f32 %v113, %v470
    %v472 = vpop.f32.mrb[0].mxu0
    %v473 = vadd.f32 %v117, %v472
    %v474 = vpop.f32.mrb[0].mxu0
    %v475 = vadd.f32 %v113, %v474
    %v476 = vpop.f32.mrb[0].mxu0
    %v477 = vadd.f32 %v117, %v476
    %478 = vmatprep.mubr.bf16.mxu0 0
    %479 = vmatmul.mubr.bf16.gmra.mrb[0].mxu0 %v200
    %v480 = vpop.f32.mrb[0].mxu0
    %v481 = vadd.f32 %v113, %v480
    %v482 = vpop.f32.mrb[0].mxu0
    %v483 = vadd.f32 %v117, %v482
    %v484 = vpop.f32.mrb[0].mxu0
    %v485 = vadd.f32 %v113, %v484
    %v486 = vpop.f32.mrb[0].mxu0
    %v487 = vadd.f32 %v117, %v486
    %488 = vmatprep.mubr.bf16.mxu0 0
    %489 = vmatmul.mubr.bf16.gmra.mrb[0].mxu0 %v201
    %v490 = vpop.f32.mrb[0].mxu0
    %v491 = vadd.f32 %v113, %v490
    %v492 = vpop.f32.mrb[0].mxu0
    %v493 = vadd.f32 %v117, %v492
    %v494 = vpop.f32.mrb[0].mxu0
    %v495 = vadd.f32 %v113, %v494
    %v496 = vpop.f32.mrb[0].mxu0
    %v497 = vadd.f32 %v117, %v496
    %498 = vmatprep.mubr.bf16.mxu0 0
    %499 = vmatmul.mubr.bf16.gmra.mrb[0].mxu0 %v202
    %v500 = vpop.f32.mrb[0].mxu0
    %v501 = vadd.f32 %v113, %v500
    %v502 = vpop.f32.mrb[0].mxu0
    %v503 = vadd.f32 %v117, %v502
    %v504 = vpop.f32.mrb[0].mxu0
    %v505 = vadd.f32 %v113, %v504
    %v506 = vpop.f32.mrb[0].mxu0
    %v507 = vadd.f32 %v117, %v506
    %508 = vmatprep.mubr.bf16.mxu0 0
    %509 = vmatmul.mubr.bf16.gmra.mrb[0].mxu0 %v203
    %v510 = vpop.f32.mrb[0].mxu0
    %v511 = vadd.f32 %v113, %v510
    %v512 = vpop.f32.mrb[0].mxu0
    %v513 = vadd.f32 %v117, %v512
    %v514 = vpop.f32.mrb[0].mxu0
    %v515 = vadd.f32 %v113, %v514
    %v516 = vpop.f32.mrb[0].mxu0
    %v517 = vadd.f32 %v117, %v516
    %518 = vmatprep.mubr.bf16.mxu0 0
    %519 = vmatmul.mubr.bf16.gmra.mrb[0].mxu0 %v204
    %v520 = vpop.f32.mrb[0].mxu0
    %v521 = vadd.f32 %v113, %v520
    %v522 = vpop.f32.mrb[0].mxu0
    %v523 = vadd.f32 %v117, %v522
    %v524 = vpop.f32.mrb[0].mxu0
    %v525 = vadd.f32 %v113, %v524
    %v526 = vpop.f32.mrb[0].mxu0
    %v527 = vadd.f32 %v117, %v526
    %528 = vmatprep.mubr.bf16.mxu0 0
    %529 = vmatmul.mubr.bf16.gmra.mrb[0].mxu0 %v205
    %v530 = vpop.f32.mrb[0].mxu0
    %v531 = vadd.f32 %v113, %v530
    %v532 = vpop.f32.mrb[0].mxu0
    %v533 = vadd.f32 %v117, %v532
    %v534 = vpop.f32.mrb[0].mxu0
    %v535 = vadd.f32 %v113, %v534
    %v536 = vpop.f32.mrb[0].mxu0
    %v537 = vadd.f32 %v117, %v536
    %538 = vmatprep.mubr.bf16.mxu0 0
    %539 = vmatmul.mubr.bf16.gmra.mrb[0].mxu0 %v206
    %v540 = vpop.f32.mrb[0].mxu0
    %v541 = vadd.f32 %v113, %v540
    %v542 = vpop.f32.mrb[0].mxu0
    %v543 = vadd.f32 %v117, %v542
    %v544 = vpop.f32.mrb[0].mxu0
    %v545 = vadd.f32 %v113, %v544
    %v546 = vpop.f32.mrb[0].mxu0
    %v547 = vadd.f32 %v117, %v546
    %548 = vmatprep.mubr.bf16.mxu0 0
    %549 = vmatmul.mubr.bf16.gmra.mrb[0].mxu0 %v207
    %v550 = vpop.f32.mrb[0].mxu0
    %v551 = vadd.f32 %v113, %v550
    %v552 = vpop.f32.mrb[0].mxu0
    %v553 = vadd.f32 %v117, %v552
    %v554 = vpop.f32.mrb[0].mxu0
    %v555 = vadd.f32 %v113, %v554
    %v556 = vpop.f32.mrb[0].mxu0
    %v557 = vadd.f32 %v117, %v556
    %558 = vmatprep.mubr.bf16.mxu0 0
    %559 = vmatmul.mubr.bf16.gmra.mrb[0].mxu0 %v208
    %v560 = vpop.f32.mrb[0].mxu0
    %v561 = vadd.f32 %v113, %v560
    %v562 = vpop.f32.mrb[0].mxu0
    %v563 = vadd.f32 %v117, %v562
    %v564 = vpop.f32.mrb[0].mxu0
    %v565 = vadd.f32 %v113, %v564
    %v566 = vpop.f32.mrb[0].mxu0
    %v567 = vadd.f32 %v117, %v566
    %568 = vmatprep.mubr.bf16.mxu0 0
    %569 = vmatmul.mubr.bf16.gmra.mrb[0].mxu0 %v209
    %v570 = vpop.f32.mrb[0].mxu0
    %v571 = vadd.f32 %v113, %v570
    %v572 = vpop.f32.mrb[0].mxu0
    %v573 = vadd.f32 %v117, %v572
    %v574 = vpop.f32.mrb[0].mxu0
    %v575 = vadd.f32 %v113, %v574
    %v576 = vpop.f32.mrb[0].mxu0
    %v577 = vadd.f32 %v117, %v576
    %578 = vdwg.mxu0
    %579 = vmatprep.subr.bf16.mxu0 %v325
    %580 = vmatpush1.bf16.msra.mxu0 %v324
    %581 = vmatprep.subr.bf16.mxu0 %v329
    %582 = vmatpush1.bf16.msra.mxu0 %v328
    %583 = vmatprep.subr.bf16.mxu0 %v333
    %584 = vmatpush1.bf16.msra.mxu0 %v332
    %585 = vmatprep.subr.bf16.mxu0 %v337
    %586 = vmatpush1.bf16.msra.mxu0 %v336
    %587 = vmatprep.subr.bf16.mxu0 %v341
    %588 = vmatpush1.bf16.msra.mxu0 %v340
    %589 = vmatprep.subr.bf16.mxu0 %v345
    %590 = vmatpush1.bf16.msra.mxu0 %v344
    %591 = vmatprep.subr.bf16.mxu0 %v349
    %592 = vmatpush1.bf16.msra.mxu0 %v348
    %593 = vmatprep.subr.bf16.mxu0 %v353
    %594 = vmatpush1.bf16.msra.mxu0 %v352
    %595 = vmatprep.subr.bf16.mxu0 0
    %596 = vmatpush1.bf16.msra.mxu0 0
    %597 = vmatprep.subr.bf16.mxu0 0
    %598 = vmatpush1.bf16.msra.mxu0 0
    %599 = vmatprep.subr.bf16.mxu0 0
    %600 = vmatpush1.bf16.msra.mxu0 0
    %601 = vmatprep.subr.bf16.mxu0 0
    %602 = vmatpush1.bf16.msra.mxu0 0
    %603 = vmatprep.subr.bf16.mxu0 0
    %604 = vmatpush1.bf16.msra.mxu0 0
    %605 = vmatprep.subr.bf16.mxu0 0
    %606 = vmatpush1.bf16.msra.mxu0 0
    %607 = vmatprep.subr.bf16.mxu0 0
    %608 = vmatpush1.bf16.msra.mxu0 0
    %609 = vmatprep.subr.bf16.mxu0 0
    %610 = vmatpush1.bf16.msra.mxu0 0
    %611 = vmatprep.mubr.bf16.mxu0 0
    %612 = vmatmul.mubr.bf16.gmra.mrb[0].mxu0 %v194
    %v613 = vpop.f32.mrb[0].mxu0
    %v614 = vadd.f32 %v121, %v613
    %v615 = vpop.f32.mrb[0].mxu0
    %v616 = vadd.f32 %v125, %v615
    %v617 = vpop.f32.mrb[0].mxu0
    %v618 = vadd.f32 %v121, %v617
    %v619 = vpop.f32.mrb[0].mxu0
    %v620 = vadd.f32 %v125, %v619
    %621 = vmatprep.mubr.bf16.mxu0 0
    %622 = vmatmul.mubr.bf16.gmra.mrb[0].mxu0 %v195
    %v623 = vpop.f32.mrb[0].mxu0
    %v624 = vadd.f32 %v121, %v623
    %v625 = vpop.f32.mrb[0].mxu0
    %v626 = vadd.f32 %v125, %v625
    %v627 = vpop.f32.mrb[0].mxu0
    %v628 = vadd.f32 %v121, %v627
    %v629 = vpop.f32.mrb[0].mxu0
    %v630 = vadd.f32 %v125, %v629
    %631 = vmatprep.mubr.bf16.mxu0 0
    %632 = vmatmul.mubr.bf16.gmra.mrb[0].mxu0 %v196
    %v633 = vpop.f32.mrb[0].mxu0
    %v634 = vadd.f32 %v121, %v633
    %v635 = vpop.f32.mrb[0].mxu0
    %v636 = vadd.f32 %v125, %v635
    %v637 = vpop.f32.mrb[0].mxu0
    %v638 = vadd.f32 %v121, %v637
    %v639 = vpop.f32.mrb[0].mxu0
    %v640 = vadd.f32 %v125, %v639
    %641 = vmatprep.mubr.bf16.mxu0 0
    %642 = vmatmul.mubr.bf16.gmra.mrb[0].mxu0 %v197
    %v643 = vpop.f32.mrb[0].mxu0
    %v644 = vadd.f32 %v121, %v643
    %v645 = vpop.f32.mrb[0].mxu0
    %v646 = vadd.f32 %v125, %v645
    %v647 = vpop.f32.mrb[0].mxu0
    %v648 = vadd.f32 %v121, %v647
    %v649 = vpop.f32.mrb[0].mxu0
    %v650 = vadd.f32 %v125, %v649
    %651 = vmatprep.mubr.bf16.mxu0 0
    %652 = vmatmul.mubr.bf16.gmra.mrb[0].mxu0 %v198
    %v653 = vpop.f32.mrb[0].mxu0
    %v654 = vadd.f32 %v121, %v653
    %v655 = vpop.f32.mrb[0].mxu0
    %v656 = vadd.f32 %v125, %v655
    %v657 = vpop.f32.mrb[0].mxu0
    %v658 = vadd.f32 %v121, %v657
    %v659 = vpop.f32.mrb[0].mxu0
    %v660 = vadd.f32 %v125, %v659
    %661 = vmatprep.mubr.bf16.mxu0 0
    %662 = vmatmul.mubr.bf16.gmra.mrb[0].mxu0 %v199
    %v663 = vpop.f32.mrb[0].mxu0
    %v664 = vadd.f32 %v121, %v663
    %v665 = vpop.f32.mrb[0].mxu0
    %v666 = vadd.f32 %v125, %v665
    %v667 = vpop.f32.mrb[0].mxu0
    %v668 = vadd.f32 %v121, %v667
    %v669 = vpop.f32.mrb[0].mxu0
    %v670 = vadd.f32 %v125, %v669
    %671 = vmatprep.mubr.bf16.mxu0 0
    %672 = vmatmul.mubr.bf16.gmra.mrb[0].mxu0 %v200
    %v673 = vpop.f32.mrb[0].mxu0
    %v674 = vadd.f32 %v121, %v673
    %v675 = vpop.f32.mrb[0].mxu0
    %v676 = vadd.f32 %v125, %v675
    %v677 = vpop.f32.mrb[0].mxu0
    %v678 = vadd.f32 %v121, %v677
    %v679 = vpop.f32.mrb[0].mxu0
    %v680 = vadd.f32 %v125, %v679
    %681 = vmatprep.mubr.bf16.mxu0 0
    %682 = vmatmul.mubr.bf16.gmra.mrb[0].mxu0 %v201
    %v683 = vpop.f32.mrb[0].mxu0
    %v684 = vadd.f32 %v121, %v683
    %v685 = vpop.f32.mrb[0].mxu0
    %v686 = vadd.f32 %v125, %v685
    %v687 = vpop.f32.mrb[0].mxu0
    %v688 = vadd.f32 %v121, %v687
    %v689 = vpop.f32.mrb[0].mxu0
    %v690 = vadd.f32 %v125, %v689
    %691 = vmatprep.mubr.bf16.mxu0 0
    %692 = vmatmul.mubr.bf16.gmra.mrb[0].mxu0 %v202
    %v693 = vpop.f32.mrb[0].mxu0
    %v694 = vadd.f32 %v121, %v693
    %v695 = vpop.f32.mrb[0].mxu0
    %v696 = vadd.f32 %v125, %v695
    %v697 = vpop.f32.mrb[0].mxu0
    %v698 = vadd.f32 %v121, %v697
    %v699 = vpop.f32.mrb[0].mxu0
    %v700 = vadd.f32 %v125, %v699
    %701 = vmatprep.mubr.bf16.mxu0 0
    %702 = vmatmul.mubr.bf16.gmra.mrb[0].mxu0 %v203
    %v703 = vpop.f32.mrb[0].mxu0
    %v704 = vadd.f32 %v121, %v703
    %v705 = vpop.f32.mrb[0].mxu0
    %v706 = vadd.f32 %v125, %v705
    %v707 = vpop.f32.mrb[0].mxu0
    %v708 = vadd.f32 %v121, %v707
    %v709 = vpop.f32.mrb[0].mxu0
    %v710 = vadd.f32 %v125, %v709
    %711 = vmatprep.mubr.bf16.mxu0 0
    %712 = vmatmul.mubr.bf16.gmra.mrb[0].mxu0 %v204
    %v713 = vpop.f32.mrb[0].mxu0
    %v714 = vadd.f32 %v121, %v713
    %v715 = vpop.f32.mrb[0].mxu0
    %v716 = vadd.f32 %v125, %v715
    %v717 = vpop.f32.mrb[0].mxu0
    %v718 = vadd.f32 %v121, %v717
    %v719 = vpop.f32.mrb[0].mxu0
    %v720 = vadd.f32 %v125, %v719
    %721 = vmatprep.mubr.bf16.mxu0 0
    %722 = vmatmul.mubr.bf16.gmra.mrb[0].mxu0 %v205
    %v723 = vpop.f32.mrb[0].mxu0
    %v724 = vadd.f32 %v121, %v723
    %v725 = vpop.f32.mrb[0].mxu0
    %v726 = vadd.f32 %v125, %v725
    %v727 = vpop.f32.mrb[0].mxu0
    %v728 = vadd.f32 %v121, %v727
    %v729 = vpop.f32.mrb[0].mxu0
    %v730 = vadd.f32 %v125, %v729
    %731 = vmatprep.mubr.bf16.mxu0 0
    %732 = vmatmul.mubr.bf16.gmra.mrb[0].mxu0 %v206
    %v733 = vpop.f32.mrb[0].mxu0
    %v734 = vadd.f32 %v121, %v733
    %v735 = vpop.f32.mrb[0].mxu0
    %v736 = vadd.f32 %v125, %v735
    %v737 = vpop.f32.mrb[0].mxu0
    %v738 = vadd.f32 %v121, %v737
    %v739 = vpop.f32.mrb[0].mxu0
    %v740 = vadd.f32 %v125, %v739
    %741 = vmatprep.mubr.bf16.mxu0 0
    %742 = vmatmul.mubr.bf16.gmra.mrb[0].mxu0 %v207
    %v743 = vpop.f32.mrb[0].mxu0
    %v744 = vadd.f32 %v121, %v743
    %v745 = vpop.f32.mrb[0].mxu0
    %v746 = vadd.f32 %v125, %v745
    %v747 = vpop.f32.mrb[0].mxu0
    %v748 = vadd.f32 %v121, %v747
    %v749 = vpop.f32.mrb[0].mxu0
    %v750 = vadd.f32 %v125, %v749
    %751 = vmatprep.mubr.bf16.mxu0 0
    %752 = vmatmul.mubr.bf16.gmra.mrb[0].mxu0 %v208
    %v753 = vpop.f32.mrb[0].mxu0
    %v754 = vadd.f32 %v121, %v753
    %v755 = vpop.f32.mrb[0].mxu0
    %v756 = vadd.f32 %v125, %v755
    %v757 = vpop.f32.mrb[0].mxu0
    %v758 = vadd.f32 %v121, %v757
    %v759 = vpop.f32.mrb[0].mxu0
    %v760 = vadd.f32 %v125, %v759
    %761 = vmatprep.mubr.bf16.mxu0 0
    %762 = vmatmul.mubr.bf16.gmra.mrb[0].mxu0 %v209
    %v763 = vpop.f32.mrb[0].mxu0
    %v764 = vadd.f32 %v121, %v763
    %v765 = vpop.f32.mrb[0].mxu0
    %v766 = vadd.f32 %v125, %v765
    %v767 = vpop.f32.mrb[0].mxu0
    %v768 = vadd.f32 %v121, %v767
    %v769 = vpop.f32.mrb[0].mxu0
    %v770 = vadd.f32 %v125, %v769
    %771 = vdwg.mxu0
    %v772 = vpack.c.bf16 %v425, %v421
    %v773 = vpack.c.bf16 %v427, %v423
    %v774 = vpack.c.bf16 %v618, %v614
    %v775 = vpack.c.bf16 %v620, %v616
    %v776 = vpack.c.bf16 %v435, %v431
    %v777 = vpack.c.bf16 %v437, %v433
    %v778 = vpack.c.bf16 %v628, %v624
    %v779 = vpack.c.bf16 %v630, %v626
    %v780 = vpack.c.bf16 %v445, %v441
    %v781 = vpack.c.bf16 %v447, %v443
    %v782 = vpack.c.bf16 %v638, %v634
    %v783 = vpack.c.bf16 %v640, %v636
    %v784 = vpack.c.bf16 %v455, %v451
    %v785 = vpack.c.bf16 %v457, %v453
    %v786 = vpack.c.bf16 %v648, %v644
    %v787 = vpack.c.bf16 %v650, %v646
    %v788 = vpack.c.bf16 %v465, %v461
    %v789 = vpack.c.bf16 %v467, %v463
    %v790 = vpack.c.bf16 %v658, %v654
    %v791 = vpack.c.bf16 %v660, %v656
    %v792 = vpack.c.bf16 %v475, %v471
    %v793 = vpack.c.bf16 %v477, %v473
    %v794 = vpack.c.bf16 %v668, %v664
    %v795 = vpack.c.bf16 %v670, %v666
    %v796 = vpack.c.bf16 %v485, %v481
    %v797 = vpack.c.bf16 %v487, %v483
    %v798 = vpack.c.bf16 %v678, %v674
    %v799 = vpack.c.bf16 %v680, %v676
    %v800 = vpack.c.bf16 %v495, %v491
    %v801 = vpack.c.bf16 %v497, %v493
    %v802 = vpack.c.bf16 %v688, %v684
    %v803 = vpack.c.bf16 %v690, %v686
    %v804 = vpack.c.bf16 %v505, %v501
    %v805 = vpack.c.bf16 %v507, %v503
    %v806 = vpack.c.bf16 %v698, %v694
    %v807 = vpack.c.bf16 %v700, %v696
    %v808 = vpack.c.bf16 %v515, %v511
    %v809 = vpack.c.bf16 %v517, %v513
    %v810 = vpack.c.bf16 %v708, %v704
    %v811 = vpack.c.bf16 %v710, %v706
    %v812 = vpack.c.bf16 %v525, %v521
    %v813 = vpack.c.bf16 %v527, %v523
    %v814 = vpack.c.bf16 %v718, %v714
    %v815 = vpack.c.bf16 %v720, %v716
    %v816 = vpack.c.bf16 %v535, %v531
    %v817 = vpack.c.bf16 %v537, %v533
    %v818 = vpack.c.bf16 %v728, %v724
    %v819 = vpack.c.bf16 %v730, %v726
    %v820 = vpack.c.bf16 %v545, %v541
    %v821 = vpack.c.bf16 %v547, %v543
    %v822 = vpack.c.bf16 %v738, %v734
    %v823 = vpack.c.bf16 %v740, %v736
    %v824 = vpack.c.bf16 %v555, %v551
    %v825 = vpack.c.bf16 %v557, %v553
    %v826 = vpack.c.bf16 %v748, %v744
    %v827 = vpack.c.bf16 %v750, %v746
    %v828 = vpack.c.bf16 %v565, %v561
    %v829 = vpack.c.bf16 %v567, %v563
    %v830 = vpack.c.bf16 %v758, %v754
    %v831 = vpack.c.bf16 %v760, %v756
    %v832 = vpack.c.bf16 %v575, %v571
    %v833 = vpack.c.bf16 %v577, %v573
    %v834 = vpack.c.bf16 %v768, %v764
    %v835 = vpack.c.bf16 %v770, %v766
    %v900 = vunpack.c.l.b16 %v772
    %v901 = vunpack.c.l.b16 %v773
    %v902 = vunpack.c.l.b16 %v774
    %v903 = vunpack.c.l.b16 %v775
    %v904 = vunpack.c.h.b16 %v772
    %v905 = vunpack.c.h.b16 %v773
    %v906 = vunpack.c.h.b16 %v774
    %v907 = vunpack.c.h.b16 %v775
    %v908 = vunpack.c.l.b16 %v776
    %v909 = vunpack.c.l.b16 %v777
    %v910 = vunpack.c.l.b16 %v778
    %v911 = vunpack.c.l.b16 %v779
    %v912 = vunpack.c.h.b16 %v776
    %v913 = vunpack.c.h.b16 %v777
    %v914 = vunpack.c.h.b16 %v778
    %v915 = vunpack.c.h.b16 %v779
    %v916 = vunpack.c.l.b16 %v780
    %v917 = vunpack.c.l.b16 %v781
    %v918 = vunpack.c.l.b16 %v782
    %v919 = vunpack.c.l.b16 %v783
    %v920 = vunpack.c.h.b16 %v780
    %v921 = vunpack.c.h.b16 %v781
    %v922 = vunpack.c.h.b16 %v782
    %v923 = vunpack.c.h.b16 %v783
    %v924 = vunpack.c.l.b16 %v784
    %v925 = vunpack.c.l.b16 %v785
    %v926 = vunpack.c.l.b16 %v786
    %v927 = vunpack.c.l.b16 %v787
    %v928 = vunpack.c.h.b16 %v784
    %v929 = vunpack.c.h.b16 %v785
    %v930 = vunpack.c.h.b16 %v786
    %v931 = vunpack.c.h.b16 %v787
    %v932 = vunpack.c.l.b16 %v788
    %v933 = vunpack.c.l.b16 %v789
    %v934 = vunpack.c.l.b16 %v790
    %v935 = vunpack.c.l.b16 %v791
    %v936 = vunpack.c.h.b16 %v788
    %v937 = vunpack.c.h.b16 %v789
    %v938 = vunpack.c.h.b16 %v790
    %v939 = vunpack.c.h.b16 %v791
    %v940 = vunpack.c.l.b16 %v792
    %v941 = vunpack.c.l.b16 %v793
    %v942 = vunpack.c.l.b16 %v794
    %v943 = vunpack.c.l.b16 %v795
    %v944 = vunpack.c.h.b16 %v792
    %v945 = vunpack.c.h.b16 %v793
    %v946 = vunpack.c.h.b16 %v794
    %v947 = vunpack.c.h.b16 %v795
    %v948 = vunpack.c.l.b16 %v796
    %v949 = vunpack.c.l.b16 %v797
    %v950 = vunpack.c.l.b16 %v798
    %v951 = vunpack.c.l.b16 %v799
    %v952 = vunpack.c.h.b16 %v796
    %v953 = vunpack.c.h.b16 %v797
    %v954 = vunpack.c.h.b16 %v798
    %v955 = vunpack.c.h.b16 %v799
    %v956 = vunpack.c.l.b16 %v800
    %v957 = vunpack.c.l.b16 %v801
    %v958 = vunpack.c.l.b16 %v802
    %v959 = vunpack.c.l.b16 %v803
    %v960 = vunpack.c.h.b16 %v800
    %v961 = vunpack.c.h.b16 %v801
    %v962 = vunpack.c.h.b16 %v802
    %v963 = vunpack.c.h.b16 %v803
    %v964 = vunpack.c.l.b16 %v804
    %v965 = vunpack.c.l.b16 %v805
    %v966 = vunpack.c.l.b16 %v806
    %v967 = vunpack.c.l.b16 %v807
    %v968 = vunpack.c.h.b16 %v804
    %v969 = vunpack.c.h.b16 %v805
    %v970 = vunpack.c.h.b16 %v806
    %v971 = vunpack.c.h.b16 %v807
    %v972 = vunpack.c.l.b16 %v808
    %v973 = vunpack.c.l.b16 %v809
    %v974 = vunpack.c.l.b16 %v810
    %v975 = vunpack.c.l.b16 %v811
    %v976 = vunpack.c.h.b16 %v808
    %v977 = vunpack.c.h.b16 %v809
    %v978 = vunpack.c.h.b16 %v810
    %v979 = vunpack.c.h.b16 %v811
    %v980 = vunpack.c.l.b16 %v812
    %v981 = vunpack.c.l.b16 %v813
    %v982 = vunpack.c.l.b16 %v814
    %v983 = vunpack.c.l.b16 %v815
    %v984 = vunpack.c.h.b16 %v812
    %v985 = vunpack.c.h.b16 %v813
    %v986 = vunpack.c.h.b16 %v814
    %v987 = vunpack.c.h.b16 %v815
    %v988 = vunpack.c.l.b16 %v816
    %v989 = vunpack.c.l.b16 %v817
    %v990 = vunpack.c.l.b16 %v818
    %v991 = vunpack.c.l.b16 %v819
    %v992 = vunpack.c.h.b16 %v816
    %v993 = vunpack.c.h.b16 %v817
    %v994 = vunpack.c.h.b16 %v818
    %v995 = vunpack.c.h.b16 %v819
    %v996 = vunpack.c.l.b16 %v820
    %v997 = vunpack.c.l.b16 %v821
    %v998 = vunpack.c.l.b16 %v822
    %v999 = vunpack.c.l.b16 %v823
    %v1000 = vunpack.c.h.b16 %v820
    %v1001 = vunpack.c.h.b16 %v821
    %v1002 = vunpack.c.h.b16 %v822
    %v1003 = vunpack.c.h.b16 %v823
    %v1004 = vunpack.c.l.b16 %v824
    %v1005 = vunpack.c.l.b16 %v825
    %v1006 = vunpack.c.l.b16 %v826
    %v1007 = vunpack.c.l.b16 %v827
    %v1008 = vunpack.c.h.b16 %v824
    %v1009 = vunpack.c.h.b16 %v825
    %v1010 = vunpack.c.h.b16 %v826
    %v1011 = vunpack.c.h.b16 %v827
    %v1012 = vunpack.c.l.b16 %v828
    %v1013 = vunpack.c.l.b16 %v829
    %v1014 = vunpack.c.l.b16 %v830
    %v1015 = vunpack.c.l.b16 %v831
    %v1016 = vunpack.c.h.b16 %v828
    %v1017 = vunpack.c.h.b16 %v829
    %v1018 = vunpack.c.h.b16 %v830
    %v1019 = vunpack.c.h.b16 %v831
    %v1020 = vunpack.c.l.b16 %v832
    %v1021 = vunpack.c.l.b16 %v833
    %v1022 = vunpack.c.l.b16 %v834
    %v1023 = vunpack.c.l.b16 %v835
    %v1024 = vunpack.c.h.b16 %v832
    %v1025 = vunpack.c.h.b16 %v833
    %v1026 = vunpack.c.h.b16 %v834
    %v1027 = vunpack.c.h.b16 %v835
    %v1028 = vpack.c.b16 %v901, %v900
    %v1029 = vpack.c.b16 %v903, %v902
    %v1030 = vpack.c.b16 %v905, %v904
    %v1031 = vpack.c.b16 %v907, %v906
    %v1032 = vpack.c.b16 %v909, %v908
    %v1033 = vpack.c.b16 %v911, %v910
    %v1034 = vpack.c.b16 %v913, %v912
    %v1035 = vpack.c.b16 %v915, %v914
    %v1036 = vpack.c.b16 %v917, %v916
    %v1037 = vpack.c.b16 %v919, %v918
    %v1038 = vpack.c.b16 %v921, %v920
    %v1039 = vpack.c.b16 %v923, %v922
    %v1040 = vpack.c.b16 %v925, %v924
    %v1041 = vpack.c.b16 %v927, %v926
    %v1042 = vpack.c.b16 %v929, %v928
    %v1043 = vpack.c.b16 %v931, %v930
    %v1044 = vpack.c.b16 %v933, %v932
    %v1045 = vpack.c.b16 %v935, %v934
    %v1046 = vpack.c.b16 %v937, %v936
    %v1047 = vpack.c.b16 %v939, %v938
    %v1048 = vpack.c.b16 %v941, %v940
    %v1049 = vpack.c.b16 %v943, %v942
    %v1050 = vpack.c.b16 %v945, %v944
    %v1051 = vpack.c.b16 %v947, %v946
    %v1052 = vpack.c.b16 %v949, %v948
    %v1053 = vpack.c.b16 %v951, %v950
    %v1054 = vpack.c.b16 %v953, %v952
    %v1055 = vpack.c.b16 %v955, %v954
    %v1056 = vpack.c.b16 %v957, %v956
    %v1057 = vpack.c.b16 %v959, %v958
    %v1058 = vpack.c.b16 %v961, %v960
    %v1059 = vpack.c.b16 %v963, %v962
    %v1060 = vpack.c.b16 %v965, %v964
    %v1061 = vpack.c.b16 %v967, %v966
    %v1062 = vpack.c.b16 %v969, %v968
    %v1063 = vpack.c.b16 %v971, %v970
    %v1064 = vpack.c.b16 %v973, %v972
    %v1065 = vpack.c.b16 %v975, %v974
    %v1066 = vpack.c.b16 %v977, %v976
    %v1067 = vpack.c.b16 %v979, %v978
    %v1068 = vpack.c.b16 %v981, %v980
    %v1069 = vpack.c.b16 %v983, %v982
    %v1070 = vpack.c.b16 %v985, %v984
    %v1071 = vpack.c.b16 %v987, %v986
    %v1072 = vpack.c.b16 %v989, %v988
    %v1073 = vpack.c.b16 %v991, %v990
    %v1074 = vpack.c.b16 %v993, %v992
    %v1075 = vpack.c.b16 %v995, %v994
    %v1076 = vpack.c.b16 %v997, %v996
    %v1077 = vpack.c.b16 %v999, %v998
    %v1078 = vpack.c.b16 %v1001, %v1000
    %v1079 = vpack.c.b16 %v1003, %v1002
    %v1080 = vpack.c.b16 %v1005, %v1004
    %v1081 = vpack.c.b16 %v1007, %v1006
    %v1082 = vpack.c.b16 %v1009, %v1008
    %v1083 = vpack.c.b16 %v1011, %v1010
    %v1084 = vpack.c.b16 %v1013, %v1012
    %v1085 = vpack.c.b16 %v1015, %v1014
    %v1086 = vpack.c.b16 %v1017, %v1016
    %v1087 = vpack.c.b16 %v1019, %v1018
    %v1088 = vpack.c.b16 %v1021, %v1020
    %v1089 = vpack.c.b16 %v1023, %v1022
    %v1090 = vpack.c.b16 %v1025, %v1024
    %v1091 = vpack.c.b16 %v1027, %v1026
    %1156 = vst [vmem:[#allocation7] sm:$0xff] %v1028
    %1157 = vst [vmem:[#allocation7 + $0x8] sm:$0xff] %v1029
    %1158 = vst [vmem:[#allocation7 + $0x10] sm:$0xff] %v1030
    %1159 = vst [vmem:[#allocation7 + $0x18] sm:$0xff] %v1031
    %1160 = vst [vmem:[#allocation7 + $0x20] sm:$0xff] %v1032
    %1161 = vst [vmem:[#allocation7 + $0x28] sm:$0xff] %v1033
    %1162 = vst [vmem:[#allocation7 + $0x30] sm:$0xff] %v1034
    %1163 = vst [vmem:[#allocation7 + $0x38] sm:$0xff] %v1035
    %1164 = vst [vmem:[#allocation7 + $0x40] sm:$0xff] %v1036
    %1165 = vst [vmem:[#allocation7 + $0x48] sm:$0xff] %v1037
    %1166 = vst [vmem:[#allocation7 + $0x50] sm:$0xff] %v1038
    %1167 = vst [vmem:[#allocation7 + $0x58] sm:$0xff] %v1039
    %1168 = vst [vmem:[#allocation7 + $0x60] sm:$0xff] %v1040
    %1169 = vst [vmem:[#allocation7 + $0x68] sm:$0xff] %v1041
    %1170 = vst [vmem:[#allocation7 + $0x70] sm:$0xff] %v1042
    %1171 = vst [vmem:[#allocation7 + $0x78] sm:$0xff] %v1043
    %1172 = vst [vmem:[#allocation7 + $0x80] sm:$0xff] %v1044
    %1173 = vst [vmem:[#allocation7 + $0x88] sm:$0xff] %v1045
    %1174 = vst [vmem:[#allocation7 + $0x90] sm:$0xff] %v1046
    %1175 = vst [vmem:[#allocation7 + $0x98] sm:$0xff] %v1047
    %1176 = vst [vmem:[#allocation7 + $0xa0] sm:$0xff] %v1048
    %1177 = vst [vmem:[#allocation7 + $0xa8] sm:$0xff] %v1049
    %1178 = vst [vmem:[#allocation7 + $0xb0] sm:$0xff] %v1050
    %1179 = vst [vmem:[#allocation7 + $0xb8] sm:$0xff] %v1051
    %1180 = vst [vmem:[#allocation7 + $0xc0] sm:$0xff] %v1052
    %1181 = vst [vmem:[#allocation7 + $0xc8] sm:$0xff] %v1053
    %1182 = vst [vmem:[#allocation7 + $0xd0] sm:$0xff] %v1054
    %1183 = vst [vmem:[#allocation7 + $0xd8] sm:$0xff] %v1055
    %1184 = vst [vmem:[#allocation7 + $0xe0] sm:$0xff] %v1056
    %1185 = vst [vmem:[#allocation7 + $0xe8] sm:$0xff] %v1057
    %1186 = vst [vmem:[#allocation7 + $0xf0] sm:$0xff] %v1058
    %1187 = vst [vmem:[#allocation7 + $0xf8] sm:$0xff] %v1059
    %1188 = vst [vmem:[#allocation7 + $0x100] sm:$0xff] %v1060
    %1189 = vst [vmem:[#allocation7 + $0x108] sm:$0xff] %v1061
    %1190 = vst [vmem:[#allocation7 + $0x110] sm:$0xff] %v1062
    %1191 = vst [vmem:[#allocation7 + $0x118] sm:$0xff] %v1063
    %1192 = vst [vmem:[#allocation7 + $0x120] sm:$0xff] %v1064
    %1193 = vst [vmem:[#allocation7 + $0x128] sm:$0xff] %v1065
    %1194 = vst [vmem:[#allocation7 + $0x130] sm:$0xff] %v1066
    %1195 = vst [vmem:[#allocation7 + $0x138] sm:$0xff] %v1067
    %1196 = vst [vmem:[#allocation7 + $0x140] sm:$0xff] %v1068
    %1197 = vst [vmem:[#allocation7 + $0x148] sm:$0xff] %v1069
    %1198 = vst [vmem:[#allocation7 + $0x150] sm:$0xff] %v1070
    %1199 = vst [vmem:[#allocation7 + $0x158] sm:$0xff] %v1071
    %1200 = vst [vmem:[#allocation7 + $0x160] sm:$0xff] %v1072
    %1201 = vst [vmem:[#allocation7 + $0x168] sm:$0xff] %v1073
    %1202 = vst [vmem:[#allocation7 + $0x170] sm:$0xff] %v1074
    %1203 = vst [vmem:[#allocation7 + $0x178] sm:$0xff] %v1075
    %1204 = vst [vmem:[#allocation7 + $0x180] sm:$0xff] %v1076
    %1205 = vst [vmem:[#allocation7 + $0x188] sm:$0xff] %v1077
    %1206 = vst [vmem:[#allocation7 + $0x190] sm:$0xff] %v1078
    %1207 = vst [vmem:[#allocation7 + $0x198] sm:$0xff] %v1079
    %1208 = vst [vmem:[#allocation7 + $0x1a0] sm:$0xff] %v1080
    %1209 = vst [vmem:[#allocation7 + $0x1a8] sm:$0xff] %v1081
    %1210 = vst [vmem:[#allocation7 + $0x1b0] sm:$0xff] %v1082
    %1211 = vst [vmem:[#allocation7 + $0x1b8] sm:$0xff] %v1083
    %1212 = vst [vmem:[#allocation7 + $0x1c0] sm:$0xff] %v1084
    %1213 = vst [vmem:[#allocation7 + $0x1c8] sm:$0xff] %v1085
    %1214 = vst [vmem:[#allocation7 + $0x1d0] sm:$0xff] %v1086
    %1215 = vst [vmem:[#allocation7 + $0x1d8] sm:$0xff] %v1087
    %1216 = vst [vmem:[#allocation7 + $0x1e0] sm:$0xff] %v1088
    %1217 = vst [vmem:[#allocation7 + $0x1e8] sm:$0xff] %v1089
    %1218 = vst [vmem:[#allocation7 + $0x1f0] sm:$0xff] %v1090
    %1219 = vst [vmem:[#allocation7 + $0x1f8] sm:$0xff] %v1091
    // Predicated region
    $region22: #{tpu_custom_call.1} parent=1 // pred_check
      _
    $region23: #{tpu_custom_call.1} parent=1 // pred_check_branch
      %1221 = sbr.rel (0) target = $region25
    $region24: #{tpu_custom_call.1} parent=1 // pred_region
      %s1223 = ssub.s32 8192, 8192
      %1224 = vsyncadd [#allocation4], %s1223
      %s1225 = sshll.u32 [#allocation7], 4
      %s1226 = int_to_ptr.vmem [resolvable:$true] %s1225
      %1231 = dma.vmem_to_hbm [thread:$0]  %s1226, 8192, %s3, [#allocation4], 256, 256, 16
    $region25: #{tpu_custom_call.1} parent=1 // pred_fallthru
      _
    // Predicated region
    $region26: #{tpu_custom_call.1} parent=1 // pred_check
      _
    $region27: #{tpu_custom_call.1} parent=1 // pred_check_branch
      %1233 = sbr.rel (0) target = $region29
    $region28: #{tpu_custom_call.1} parent=1 // pred_region
      %1234 = dma.done [#allocation4], 8192
    $region29: #{tpu_custom_call.1} parent=1 // pred_fallthru
      _
    %1235 = vsyncpa [#allocation3], 1
    %1236 = vsyncpa [#allocation6], 1
    %1237 = vsyncpa [#allocation4], 1

</llo_original>
